<compile_context>
chip_gen: v7x
topology: tpu7x:2x2x1
jax: 0.10.0
libtpu: 0.0.40
codegen_flags: <defaults>
</compile_context>

<pallas_src>
import functools
import math

import jax
import jax.numpy as jnp
from jax.experimental import pallas as pl
from jax.experimental.pallas import tpu as pltpu


def _mha_fused_kernel(q_ref, k_ref, wq_ref, wk_ref, wv_ref, o_ref, *, num_heads):
    # q_ref:  (B, T_q, query_dim)      k_ref:  (B, T_k, key_dim)
    # wq_ref: (query_dim, num_units)   wk_ref/wv_ref: (key_dim, num_units)  [bf16]
    # o_ref:  (B, T_q, num_units)  -- heads concatenated along the lane axis.
    B, T_q, Dq = q_ref.shape
    _, T_k, Dk = k_ref.shape
    U = wq_ref.shape[-1]
    d = U // num_heads

    # Pack batch rows into the matmul M dimension (leading-dim-only reshapes:
    # layout-safe) and cast activations to bf16 for the MXU.
    qf = q_ref[...].reshape(B * T_q, Dq).astype(jnp.bfloat16)
    kf = k_ref[...].reshape(B * T_k, Dk).astype(jnp.bfloat16)

    # Bias-free linear projections on the MXU, f32 accumulation.
    # The 1/sqrt(key_dim) score scale is already folded into wq (wrapper, f32).
    q = jnp.dot(qf, wq_ref[...], preferred_element_type=jnp.float32).reshape(B, T_q, U)
    k = jnp.dot(kf, wk_ref[...], preferred_element_type=jnp.float32).reshape(B, T_k, U)
    v = jnp.dot(kf, wv_ref[...], preferred_element_type=jnp.float32).reshape(B, T_k, U)

    # bf16 copies for the attention MXU contractions (accumulate in f32).
    q_b = q.astype(jnp.bfloat16)
    k_b = k.astype(jnp.bfloat16)
    v_b = v.astype(jnp.bfloat16)

    # Per-head attention.  Heads live contiguously on the lane axis, so each
    # head is a static lane slice.  Softmax math stays in f32.
    # TODO(synk): a single head-batched dot_general ('bhqd,bhkd->bhqk') would
    # remove the per-head lane slices + lane concat, but multi-batch-dim
    # dot_general / rank-4 transposes do not lower robustly in Mosaic, so the
    # heads remain a short static loop over the known-good 'bqd,bkd->bqk' form.
    outs = []
    for h in range(num_heads):
        sl = slice(h * d, (h + 1) * d)
        # Scores via batched dot_general (no explicit k transpose materialized).
        s = jnp.einsum('bqd,bkd->bqk', q_b[:, :, sl], k_b[:, :, sl],
                       preferred_element_type=jnp.float32)          # [B, T_q, T_k]

        # Softmax over keys, f32; exact reciprocal on the EUP (own bundle slot).
        m = jnp.max(s, axis=-1, keepdims=True)
        e = jnp.exp(s - m)
        inv = pl.reciprocal(jnp.sum(e, axis=-1, keepdims=True), approx=False)
        p = (e * inv).astype(jnp.bfloat16)

        outs.append(jnp.einsum('bqk,bkd->bqd', p, v_b[:, :, sl],
                               preferred_element_type=jnp.float32))  # [B, T_q, d]

    # Concatenate heads along the lane axis -> one wide store per grid step
    # (single vst stream; matters on v5e's single vector-store slot).
    o_ref[...] = jnp.concatenate(outs, axis=-1).astype(o_ref.dtype)


def _step_vmem_bytes(bn, T_q, T_k, Dq, Dk, U, itemsize):
    """Conservative per-grid-step VMEM estimate for a batch tile of bn rows."""
    io = 2 * bn * (T_q * Dq + T_k * Dk + T_q * U) * itemsize        # double-buffered blocks
    inter = 4 * bn * (2 * (T_q + 2 * T_k) * U + 3 * T_q * T_k)      # f32/bf16 intermediates
    weights = 2 * 2 * (Dq + 2 * Dk) * U                             # bf16 weights, dbl-buffered
    return io + inter + weights


def _auto_block_n(N, T_q, T_k, Dq, Dk, U, itemsize,
                  vmem_budget=16 * 1024 * 1024):
    """Largest batch tile that (a) keeps >= 2 grid steps when N >= 2 so v7x's
    two TensorCores both get work, (b) fits the conservative VMEM budget,
    preferring an even number of grid steps for balanced megacore sharding."""
    cands = [bn for bn in range(1, N + 1)
             if N % bn == 0
             and (N // bn >= 2 or N < 2)
             and _step_vmem_bytes(bn, T_q, T_k, Dq, Dk, U, itemsize) <= vmem_budget]
    if not cands:
        return 1
    even = [bn for bn in cands if (N // bn) % 2 == 0]
    return max(even) if even else max(cands)


def multi_head_attention(query, key, w_query, w_key, w_value, num_heads, key_dim,
                         *, block_n=None):
    """query: [N, T_q, query_dim], key: [N, T_k, key_dim].
    w_*: PyTorch nn.Linear weights, shape [num_units, in_dim] (y = x @ W^T).
    Returns [N, T_q, num_units] (heads concatenated on the feature axis)."""
    N, T_q, Dq = query.shape
    Nk, T_k, Dk = key.shape
    assert Nk == N
    U = w_query.shape[0]
    H = num_heads
    assert U % H == 0

    itemsize = query.dtype.itemsize
    if block_n is None:
        block_n = _auto_block_n(N, T_q, T_k, Dq, Dk, U, itemsize)
    assert N % block_n == 0

    # Glue (tiny, done once, outside the kernel): fold the 1/sqrt(key_dim)
    # score scale into wq in f32, THEN cast the MXU weights to bf16.
    scale = 1.0 / (float(key_dim) ** 0.5)
    wq_t = (w_query.T.astype(jnp.float32) * scale).astype(jnp.bfloat16)   # [Dq, U]
    wk_t = w_key.T.astype(jnp.bfloat16)                                   # [Dk, U]
    wv_t = w_value.T.astype(jnp.bfloat16)                                 # [Dk, U]

    # Advisory cost estimate so XLA overlaps surrounding ops with the call.
    flops = (2 * N * T_q * Dq * U          # Q projection
             + 4 * N * T_k * Dk * U        # K and V projections
             + 4 * N * T_q * T_k * U)      # scores + P.V over all heads
    bytes_accessed = ((N * T_q * Dq + N * T_k * Dk + N * T_q * U) * itemsize
                      + (Dq + 2 * Dk) * U * 2)
    cost = pl.CostEstimate(flops=flops,
                           transcendentals=N * H * T_q * T_k,
                           bytes_accessed=bytes_accessed)

    # Raise the scoped-VMEM limit only when the chosen tile needs more than the
    # smallest (v5e, 16 MiB) default; cap at v7x's 64 MiB physical VMEM.
    step_bytes = _step_vmem_bytes(block_n, T_q, T_k, Dq, Dk, U, itemsize)
    vmem_limit = None
    if 2 * step_bytes > 16 * 1024 * 1024:
        vmem_limit = int(min(64 * 1024 * 1024, 2 * step_bytes))

    kernel = functools.partial(_mha_fused_kernel, num_heads=H)

    return pl.pallas_call(
        kernel,
        out_shape=jax.ShapeDtypeStruct((N, T_q, U), query.dtype),
        grid_spec=pltpu.PrefetchScalarGridSpec(
            num_scalar_prefetch=0,
            grid=(N // block_n,),
            in_specs=[
                pl.BlockSpec((block_n, T_q, Dq), lambda n: (n, 0, 0)),
                pl.BlockSpec((block_n, T_k, Dk), lambda n: (n, 0, 0)),
                # Weights: constant index map -> fetched once, kept resident.
                pl.BlockSpec((Dq, U), lambda n: (0, 0)),
                pl.BlockSpec((Dk, U), lambda n: (0, 0)),
                pl.BlockSpec((Dk, U), lambda n: (0, 0)),
            ],
            out_specs=pl.BlockSpec((block_n, T_q, U), lambda n: (n, 0, 0)),
        ),
        compiler_params=pltpu.CompilerParams(
            dimension_semantics=("parallel",),
            vmem_limit_bytes=vmem_limit),
        cost_estimate=cost,
    )(query, key, wq_t, wk_t, wv_t)
    # TODO(synk): for non-GST uses with long T_k, add a trailing "arbitrary"
    # T_k grid axis with flash-style online softmax (m/l/acc VMEM scratch,
    # pl.when init/finalize, Q projection hoisted to k==0), sized for v7x's
    # 64 MiB VMEM.  GST style-token banks are tiny (T_k ~ 10), so it is skipped.


def _reference(query, key, w_query, w_key, w_value, num_heads, key_dim):
    # Pure-JAX reference mirroring the PyTorch forward, for correctness check.
    num_units = w_query.shape[0]
    q = query @ w_query.T
    k = key @ w_key.T
    v = key @ w_value.T

    def split_heads(x):  # [N, T, U] -> [h, N, T, d]
        return jnp.stack(jnp.split(x, num_heads, axis=2), axis=0)

    qh, kh, vh = split_heads(q), split_heads(k), split_heads(v)
    scores = jnp.einsum('hntd,hnsd->hnts', qh, kh) / (float(key_dim) ** 0.5)
    p = jax.nn.softmax(scores, axis=3)
    o = jnp.einsum('hnts,hnsd->hntd', p, vh)
    return o.transpose(1, 2, 0, 3).reshape(query.shape[0], query.shape[1], num_units)


if __name__ == "__main__":
    # Small, module-consistent shapes.
    N, T_q, T_k = 2, 8, 10
    query_dim, key_dim = 32, 32
    num_units, num_heads = 64, 4

    key0 = jax.random.PRNGKey(0)
    k1, k2, k3, k4, k5 = jax.random.split(key0, 5)

    query = jax.random.normal(k1, (N, T_q, query_dim), dtype=jnp.float32)
    keyt = jax.random.normal(k2, (N, T_k, key_dim), dtype=jnp.float32)

    # Deterministic "Kaiming-uniform-ish" init for the bias-free Linear layers
    # (nn.Linear weight shape is [out_features, in_features]).
    def init_w(k, out_f, in_f):
        bound = 1.0 / math.sqrt(in_f)
        return jax.random.uniform(k, (out_f, in_f), jnp.float32, -bound, bound)

    w_query = init_w(k3, num_units, query_dim)
    w_key = init_w(k4, num_units, key_dim)
    w_value = init_w(k5, num_units, key_dim)

    out = multi_head_attention(query, keyt, w_query, w_key, w_value,
                               num_heads, key_dim)
    out = jax.block_until_ready(out)

    ref = _reference(query, keyt, w_query, w_key, w_value, num_heads, key_dim)
    assert out.shape == (N, T_q, num_units)
    err = float(jnp.max(jnp.abs(out - ref)))
    # Tolerance accounts for bf16 MXU operands vs. the f32 reference
    # (softmax itself and all accumulations are f32, reciprocal is exact).
    assert jnp.allclose(out, ref, atol=2e-2, rtol=2e-2), err
    print("KERNEL_OK")
</pallas_src>

<mosaic_0001>
module attributes {stable_mosaic.version = 11 : i64} {
  func.func @_mha_fused_kernel(%arg0: i32, %arg1: memref<1x8x32xf32, #tpu.memory_space<vmem>>, %arg2: memref<1x10x32xf32, #tpu.memory_space<vmem>>, %arg3: memref<32x64xbf16, #tpu.memory_space<vmem>>, %arg4: memref<32x64xbf16, #tpu.memory_space<vmem>>, %arg5: memref<32x64xbf16, #tpu.memory_space<vmem>>, %arg6: memref<1x8x64xf32, #tpu.memory_space<vmem>>) attributes {dimension_semantics = [#tpu.dimension_semantics<parallel>], iteration_bounds = array<i64: 2>, scalar_prefetch = 0 : i64, scratch_operands = 0 : i64, tpu.core_type = #tpu.core_type<tc>, window_params = [{transform_indices = @transform_0, window_bounds = array<i64: 1, 8, 32>}, {transform_indices = @transform_1, window_bounds = array<i64: 1, 10, 32>}, {pipeline_mode = #tpu.pipeline_mode<synchronous>, transform_indices = @transform_2, window_bounds = array<i64: 32, 64>}, {pipeline_mode = #tpu.pipeline_mode<synchronous>, transform_indices = @transform_3, window_bounds = array<i64: 32, 64>}, {pipeline_mode = #tpu.pipeline_mode<synchronous>, transform_indices = @transform_4, window_bounds = array<i64: 32, 64>}, {transform_indices = @transform_5, window_bounds = array<i64: 1, 8, 64>}]} {
    %c0 = arith.constant 0 : index
    %c0_0 = arith.constant 0 : index
    %c0_1 = arith.constant 0 : index
    %0 = vector.load %arg1[%c0, %c0_0, %c0_1] : memref<1x8x32xf32, #tpu.memory_space<vmem>>, vector<1x8x32xf32>
    %1 = vector.shape_cast %0 : vector<1x8x32xf32> to vector<8x32xf32>
    %2 = arith.truncf %1 : vector<8x32xf32> to vector<8x32xbf16>
    %c0_2 = arith.constant 0 : index
    %c0_3 = arith.constant 0 : index
    %c0_4 = arith.constant 0 : index
    %3 = vector.load %arg2[%c0_2, %c0_3, %c0_4] : memref<1x10x32xf32, #tpu.memory_space<vmem>>, vector<1x10x32xf32>
    %4 = vector.shape_cast %3 : vector<1x10x32xf32> to vector<10x32xf32>
    %5 = arith.truncf %4 : vector<10x32xf32> to vector<10x32xbf16>
    %c0_5 = arith.constant 0 : index
    %c0_6 = arith.constant 0 : index
    %6 = vector.load %arg3[%c0_5, %c0_6] : memref<32x64xbf16, #tpu.memory_space<vmem>>, vector<32x64xbf16>
    %cst = arith.constant dense<0.000000e+00> : vector<8x64xf32>
    %7 = tpu.matmul %2, %6, %cst {dimension_numbers = #tpu.dot_dimension_numbers<[1], [0], [0], [1], [0, 0, 1, 1], [], []>} : vector<8x32xbf16>, vector<32x64xbf16>, vector<8x64xf32> -> vector<8x64xf32>
    %8 = vector.shape_cast %7 : vector<8x64xf32> to vector<1x8x64xf32>
    %c0_7 = arith.constant 0 : index
    %c0_8 = arith.constant 0 : index
    %9 = vector.load %arg4[%c0_7, %c0_8] : memref<32x64xbf16, #tpu.memory_space<vmem>>, vector<32x64xbf16>
    %cst_9 = arith.constant dense<0.000000e+00> : vector<10x64xf32>
    %10 = tpu.matmul %5, %9, %cst_9 {dimension_numbers = #tpu.dot_dimension_numbers<[1], [0], [0], [1], [0, 0, 1, 1], [], []>} : vector<10x32xbf16>, vector<32x64xbf16>, vector<10x64xf32> -> vector<10x64xf32>
    %11 = vector.shape_cast %10 : vector<10x64xf32> to vector<1x10x64xf32>
    %c0_10 = arith.constant 0 : index
    %c0_11 = arith.constant 0 : index
    %12 = vector.load %arg5[%c0_10, %c0_11] : memref<32x64xbf16, #tpu.memory_space<vmem>>, vector<32x64xbf16>
    %cst_12 = arith.constant dense<0.000000e+00> : vector<10x64xf32>
    %13 = tpu.matmul %5, %12, %cst_12 {dimension_numbers = #tpu.dot_dimension_numbers<[1], [0], [0], [1], [0, 0, 1, 1], [], []>} : vector<10x32xbf16>, vector<32x64xbf16>, vector<10x64xf32> -> vector<10x64xf32>
    %14 = vector.shape_cast %13 : vector<10x64xf32> to vector<1x10x64xf32>
    %15 = arith.truncf %8 : vector<1x8x64xf32> to vector<1x8x64xbf16>
    %16 = arith.truncf %11 : vector<1x10x64xf32> to vector<1x10x64xbf16>
    %17 = arith.truncf %14 : vector<1x10x64xf32> to vector<1x10x64xbf16>
    %18 = vector.extract_strided_slice %15 {offsets = [0, 0, 0], sizes = [1, 8, 16], strides = [1, 1, 1]} : vector<1x8x64xbf16> to vector<1x8x16xbf16>
    %19 = vector.extract_strided_slice %16 {offsets = [0, 0, 0], sizes = [1, 10, 16], strides = [1, 1, 1]} : vector<1x10x64xbf16> to vector<1x10x16xbf16>
    "tpu.trace_start"() <{level = 10 : i32, message = "bqd,bkd->bqk"}> : () -> ()
    %cst_13 = arith.constant dense<0.000000e+00> : vector<1x8x10xf32>
    %20 = tpu.matmul %18, %19, %cst_13 {dimension_numbers = #tpu.dot_dimension_numbers<[2], [2], [1], [1], [0, 0, 0, 1, 1, 1], [0], [0]>} : vector<1x8x16xbf16>, vector<1x10x16xbf16>, vector<1x8x10xf32> -> vector<1x8x10xf32>
    "tpu.trace_stop"() : () -> ()
    %cst_14 = arith.constant dense<0xFF800000> : vector<1x8xf32>
    %21 = vector.multi_reduction <maximumf>, %20, %cst_14 [2] : vector<1x8x10xf32> to vector<1x8xf32>
    %22 = vector.shape_cast %21 : vector<1x8xf32> to vector<1x8x1xf32>
    %23 = vector.broadcast %22 : vector<1x8x1xf32> to vector<1x8x10xf32>
    %24 = arith.subf %20, %23 : vector<1x8x10xf32>
    %25 = math.exp %24 : vector<1x8x10xf32>
    %cst_15 = arith.constant dense<0.000000e+00> : vector<1x8xf32>
    %26 = vector.multi_reduction <add>, %25, %cst_15 [2] : vector<1x8x10xf32> to vector<1x8xf32>
    %27 = vector.shape_cast %26 : vector<1x8xf32> to vector<1x8x1xf32>
    %28 = tpu.reciprocal %27 : vector<1x8x1xf32> -> vector<1x8x1xf32>
    %29 = vector.broadcast %28 : vector<1x8x1xf32> to vector<1x8x10xf32>
    %30 = arith.mulf %25, %29 : vector<1x8x10xf32>
    %31 = arith.truncf %30 : vector<1x8x10xf32> to vector<1x8x10xbf16>
    %32 = vector.extract_strided_slice %17 {offsets = [0, 0, 0], sizes = [1, 10, 16], strides = [1, 1, 1]} : vector<1x10x64xbf16> to vector<1x10x16xbf16>
    "tpu.trace_start"() <{level = 10 : i32, message = "bqk,bkd->bqd"}> : () -> ()
    %cst_16 = arith.constant dense<0.000000e+00> : vector<1x8x16xf32>
    %33 = tpu.matmul %31, %32, %cst_16 {dimension_numbers = #tpu.dot_dimension_numbers<[2], [1], [1], [2], [0, 0, 0, 1, 1, 2], [0], [0]>} : vector<1x8x10xbf16>, vector<1x10x16xbf16>, vector<1x8x16xf32> -> vector<1x8x16xf32>
    "tpu.trace_stop"() : () -> ()
    %34 = vector.extract_strided_slice %15 {offsets = [0, 0, 16], sizes = [1, 8, 16], strides = [1, 1, 1]} : vector<1x8x64xbf16> to vector<1x8x16xbf16>
    %35 = vector.extract_strided_slice %16 {offsets = [0, 0, 16], sizes = [1, 10, 16], strides = [1, 1, 1]} : vector<1x10x64xbf16> to vector<1x10x16xbf16>
    "tpu.trace_start"() <{level = 10 : i32, message = "bqd,bkd->bqk"}> : () -> ()
    %cst_17 = arith.constant dense<0.000000e+00> : vector<1x8x10xf32>
    %36 = tpu.matmul %34, %35, %cst_17 {dimension_numbers = #tpu.dot_dimension_numbers<[2], [2], [1], [1], [0, 0, 0, 1, 1, 1], [0], [0]>} : vector<1x8x16xbf16>, vector<1x10x16xbf16>, vector<1x8x10xf32> -> vector<1x8x10xf32>
    "tpu.trace_stop"() : () -> ()
    %cst_18 = arith.constant dense<0xFF800000> : vector<1x8xf32>
    %37 = vector.multi_reduction <maximumf>, %36, %cst_18 [2] : vector<1x8x10xf32> to vector<1x8xf32>
    %38 = vector.shape_cast %37 : vector<1x8xf32> to vector<1x8x1xf32>
    %39 = vector.broadcast %38 : vector<1x8x1xf32> to vector<1x8x10xf32>
    %40 = arith.subf %36, %39 : vector<1x8x10xf32>
    %41 = math.exp %40 : vector<1x8x10xf32>
    %cst_19 = arith.constant dense<0.000000e+00> : vector<1x8xf32>
    %42 = vector.multi_reduction <add>, %41, %cst_19 [2] : vector<1x8x10xf32> to vector<1x8xf32>
    %43 = vector.shape_cast %42 : vector<1x8xf32> to vector<1x8x1xf32>
    %44 = tpu.reciprocal %43 : vector<1x8x1xf32> -> vector<1x8x1xf32>
    %45 = vector.broadcast %44 : vector<1x8x1xf32> to vector<1x8x10xf32>
    %46 = arith.mulf %41, %45 : vector<1x8x10xf32>
    %47 = arith.truncf %46 : vector<1x8x10xf32> to vector<1x8x10xbf16>
    %48 = vector.extract_strided_slice %17 {offsets = [0, 0, 16], sizes = [1, 10, 16], strides = [1, 1, 1]} : vector<1x10x64xbf16> to vector<1x10x16xbf16>
    "tpu.trace_start"() <{level = 10 : i32, message = "bqk,bkd->bqd"}> : () -> ()
    %cst_20 = arith.constant dense<0.000000e+00> : vector<1x8x16xf32>
    %49 = tpu.matmul %47, %48, %cst_20 {dimension_numbers = #tpu.dot_dimension_numbers<[2], [1], [1], [2], [0, 0, 0, 1, 1, 2], [0], [0]>} : vector<1x8x10xbf16>, vector<1x10x16xbf16>, vector<1x8x16xf32> -> vector<1x8x16xf32>
    "tpu.trace_stop"() : () -> ()
    %50 = vector.extract_strided_slice %15 {offsets = [0, 0, 32], sizes = [1, 8, 16], strides = [1, 1, 1]} : vector<1x8x64xbf16> to vector<1x8x16xbf16>
    %51 = vector.extract_strided_slice %16 {offsets = [0, 0, 32], sizes = [1, 10, 16], strides = [1, 1, 1]} : vector<1x10x64xbf16> to vector<1x10x16xbf16>
    "tpu.trace_start"() <{level = 10 : i32, message = "bqd,bkd->bqk"}> : () -> ()
    %cst_21 = arith.constant dense<0.000000e+00> : vector<1x8x10xf32>
    %52 = tpu.matmul %50, %51, %cst_21 {dimension_numbers = #tpu.dot_dimension_numbers<[2], [2], [1], [1], [0, 0, 0, 1, 1, 1], [0], [0]>} : vector<1x8x16xbf16>, vector<1x10x16xbf16>, vector<1x8x10xf32> -> vector<1x8x10xf32>
    "tpu.trace_stop"() : () -> ()
    %cst_22 = arith.constant dense<0xFF800000> : vector<1x8xf32>
    %53 = vector.multi_reduction <maximumf>, %52, %cst_22 [2] : vector<1x8x10xf32> to vector<1x8xf32>
    %54 = vector.shape_cast %53 : vector<1x8xf32> to vector<1x8x1xf32>
    %55 = vector.broadcast %54 : vector<1x8x1xf32> to vector<1x8x10xf32>
    %56 = arith.subf %52, %55 : vector<1x8x10xf32>
    %57 = math.exp %56 : vector<1x8x10xf32>
    %cst_23 = arith.constant dense<0.000000e+00> : vector<1x8xf32>
    %58 = vector.multi_reduction <add>, %57, %cst_23 [2] : vector<1x8x10xf32> to vector<1x8xf32>
    %59 = vector.shape_cast %58 : vector<1x8xf32> to vector<1x8x1xf32>
    %60 = tpu.reciprocal %59 : vector<1x8x1xf32> -> vector<1x8x1xf32>
    %61 = vector.broadcast %60 : vector<1x8x1xf32> to vector<1x8x10xf32>
    %62 = arith.mulf %57, %61 : vector<1x8x10xf32>
    %63 = arith.truncf %62 : vector<1x8x10xf32> to vector<1x8x10xbf16>
    %64 = vector.extract_strided_slice %17 {offsets = [0, 0, 32], sizes = [1, 10, 16], strides = [1, 1, 1]} : vector<1x10x64xbf16> to vector<1x10x16xbf16>
    "tpu.trace_start"() <{level = 10 : i32, message = "bqk,bkd->bqd"}> : () -> ()
    %cst_24 = arith.constant dense<0.000000e+00> : vector<1x8x16xf32>
    %65 = tpu.matmul %63, %64, %cst_24 {dimension_numbers = #tpu.dot_dimension_numbers<[2], [1], [1], [2], [0, 0, 0, 1, 1, 2], [0], [0]>} : vector<1x8x10xbf16>, vector<1x10x16xbf16>, vector<1x8x16xf32> -> vector<1x8x16xf32>
    "tpu.trace_stop"() : () -> ()
    %66 = vector.extract_strided_slice %15 {offsets = [0, 0, 48], sizes = [1, 8, 16], strides = [1, 1, 1]} : vector<1x8x64xbf16> to vector<1x8x16xbf16>
    %67 = vector.extract_strided_slice %16 {offsets = [0, 0, 48], sizes = [1, 10, 16], strides = [1, 1, 1]} : vector<1x10x64xbf16> to vector<1x10x16xbf16>
    "tpu.trace_start"() <{level = 10 : i32, message = "bqd,bkd->bqk"}> : () -> ()
    %cst_25 = arith.constant dense<0.000000e+00> : vector<1x8x10xf32>
    %68 = tpu.matmul %66, %67, %cst_25 {dimension_numbers = #tpu.dot_dimension_numbers<[2], [2], [1], [1], [0, 0, 0, 1, 1, 1], [0], [0]>} : vector<1x8x16xbf16>, vector<1x10x16xbf16>, vector<1x8x10xf32> -> vector<1x8x10xf32>
    "tpu.trace_stop"() : () -> ()
    %cst_26 = arith.constant dense<0xFF800000> : vector<1x8xf32>
    %69 = vector.multi_reduction <maximumf>, %68, %cst_26 [2] : vector<1x8x10xf32> to vector<1x8xf32>
    %70 = vector.shape_cast %69 : vector<1x8xf32> to vector<1x8x1xf32>
    %71 = vector.broadcast %70 : vector<1x8x1xf32> to vector<1x8x10xf32>
    %72 = arith.subf %68, %71 : vector<1x8x10xf32>
    %73 = math.exp %72 : vector<1x8x10xf32>
    %cst_27 = arith.constant dense<0.000000e+00> : vector<1x8xf32>
    %74 = vector.multi_reduction <add>, %73, %cst_27 [2] : vector<1x8x10xf32> to vector<1x8xf32>
    %75 = vector.shape_cast %74 : vector<1x8xf32> to vector<1x8x1xf32>
    %76 = tpu.reciprocal %75 : vector<1x8x1xf32> -> vector<1x8x1xf32>
    %77 = vector.broadcast %76 : vector<1x8x1xf32> to vector<1x8x10xf32>
    %78 = arith.mulf %73, %77 : vector<1x8x10xf32>
    %79 = arith.truncf %78 : vector<1x8x10xf32> to vector<1x8x10xbf16>
    %80 = vector.extract_strided_slice %17 {offsets = [0, 0, 48], sizes = [1, 10, 16], strides = [1, 1, 1]} : vector<1x10x64xbf16> to vector<1x10x16xbf16>
    "tpu.trace_start"() <{level = 10 : i32, message = "bqk,bkd->bqd"}> : () -> ()
    %cst_28 = arith.constant dense<0.000000e+00> : vector<1x8x16xf32>
    %81 = tpu.matmul %79, %80, %cst_28 {dimension_numbers = #tpu.dot_dimension_numbers<[2], [1], [1], [2], [0, 0, 0, 1, 1, 2], [0], [0]>} : vector<1x8x10xbf16>, vector<1x10x16xbf16>, vector<1x8x16xf32> -> vector<1x8x16xf32>
    "tpu.trace_stop"() : () -> ()
    %82 = tpu.concatenate %33, %49, %65, %81 in 2 : vector<1x8x16xf32>, vector<1x8x16xf32>, vector<1x8x16xf32>, vector<1x8x16xf32> -> vector<1x8x64xf32>
    %c0_29 = arith.constant 0 : index
    %c0_30 = arith.constant 0 : index
    %c0_31 = arith.constant 0 : index
    %83 = vector.load %arg6[%c0_29, %c0_30, %c0_31] : memref<1x8x64xf32, #tpu.memory_space<vmem>>, vector<1x8x64xf32>
    tpu.vector_store %arg6[%c0_29, %c0_30, %c0_31], %82 {strides = array<i32>} : memref<1x8x64xf32, #tpu.memory_space<vmem>>, vector<1x8x64xf32>,
    return
  }
  func.func @transform_0(%arg0: i32) -> (i32, i32, i32) {
    %c0_i32 = arith.constant 0 : i32
    %c0_i32_0 = arith.constant 0 : i32
    %c0_i32_1 = arith.constant 0 : i32
    return %arg0, %c0_i32, %c0_i32_0 : i32, i32, i32
  }
  func.func @transform_1(%arg0: i32) -> (i32, i32, i32) {
    %c0_i32 = arith.constant 0 : i32
    %c0_i32_0 = arith.constant 0 : i32
    %c0_i32_1 = arith.constant 0 : i32
    return %arg0, %c0_i32, %c0_i32_0 : i32, i32, i32
  }
  func.func @transform_2(%arg0: i32) -> (i32, i32) {
    %c0_i32 = arith.constant 0 : i32
    %c0_i32_0 = arith.constant 0 : i32
    %c0_i32_1 = arith.constant 0 : i32
    return %c0_i32, %c0_i32_0 : i32, i32
  }
  func.func @transform_3(%arg0: i32) -> (i32, i32) {
    %c0_i32 = arith.constant 0 : i32
    %c0_i32_0 = arith.constant 0 : i32
    %c0_i32_1 = arith.constant 0 : i32
    return %c0_i32, %c0_i32_0 : i32, i32
  }
  func.func @transform_4(%arg0: i32) -> (i32, i32) {
    %c0_i32 = arith.constant 0 : i32
    %c0_i32_0 = arith.constant 0 : i32
    %c0_i32_1 = arith.constant 0 : i32
    return %c0_i32, %c0_i32_0 : i32, i32
  }
  func.func @transform_5(%arg0: i32) -> (i32, i32, i32) {
    %c0_i32 = arith.constant 0 : i32
    %c0_i32_0 = arith.constant 0 : i32
    %c0_i32_1 = arith.constant 0 : i32
    return %arg0, %c0_i32, %c0_i32_0 : i32, i32, i32
  }
}

</mosaic_0001>

<llo_original>
// kernel: tpu_custom_call.1
$region0: #{tpu_custom_call.1}
  #allocation0 [shape = 'u32[]', space=smem, size = 0x4, offset = 0x4, fixed_abs, tag = 'smem constant byte address 0x4 - core index']
  #allocation1 [shape = 'u32[144,128]{1,0:T(1,128)}', space=vmem, size = 0x12000, scoped, tag = 'internal scratch']
  %s0 = inlined_call_operand.vmem [shape: f32[2,8,32], index: 0, kind: input, shape index: {}]
  %s1 = inlined_call_operand.vmem [shape: f32[2,10,32], index: 1, kind: input, shape index: {}]
  %s2 = inlined_call_operand.vmem [shape: bf16[32,64], index: 2, kind: input, shape index: {}]
  %s3 = inlined_call_operand.vmem [shape: bf16[32,64], index: 3, kind: input, shape index: {}]
  %s4 = inlined_call_operand.vmem [shape: bf16[32,64], index: 4, kind: input, shape index: {}]
  %s5 = inlined_call_operand.hbm [shape: f32[2,8,64], index: 5, kind: output, shape index: {}]
  %s6 = sld [smem:[#allocation0]]
  $region53: #{tpu_custom_call.1} parent=0
    _
  %s8 = ssub.s32 1, %s6
  %s9 = scalar_select 0, %s8, %s6
  $region1: #{tpu_custom_call.1} parent=0
    #allocation2 [shape = 'u8[8192]{0}', space=vmem, size = 0x2000, scoped, tag = 'output window, operand 0']
    #allocation3 [shape = 's32[2]{0}', space=sflag, size = 0x8, scoped, tag = 'scoped memory for tpu_custom_call.1']
    %10 = vsyncpa [#allocation3], 0
    %s11 = scalar_lea.sflag [#allocation3], 1
    %12 = vsyncpa %s11, 0
    loop: start=0, step=1, limit=4
    $region2: #{tpu_custom_call.1} parent=1 // loop_pre_header
      _
    $region3: #{tpu_custom_call.1} parent=1 // loop_header
      %s14 = sphi 0, %s18
      %p15 = scmp.ge.s32.totalorder %s14, 4
      %s24 = sphi 0, %s26
      %s27 = sphi 0, %s24
      %s28 = sphi 0, %s27
      %s44 = sphi 0, %s28
      %s50 = sphi 0, %s52
      %s53 = sphi 0, %s50
      %s54 = sphi 0, %s53
      %s70 = sphi 0, %s54
      %s74 = sphi 0, %s74
      %s76 = sphi 0, %s74
      %s77 = sphi 0, %s76
      %s91 = sphi 0, %s77
      %s95 = sphi 0, %s95
      %s97 = sphi 0, %s95
      %s98 = sphi 0, %s97
      %s112 = sphi 0, %s98
      %s116 = sphi 0, %s116
      %s118 = sphi 0, %s116
      %s119 = sphi 0, %s118
      %s133 = sphi 0, %s119
      %s139 = sphi 0, %s141
      %s142 = sphi 0, %s139
      %s143 = sphi 0, %s142
      %s159 = sphi 0, %s143
    $region4: #{tpu_custom_call.1} parent=1 // loop_header_branch
      %17 = sbr.rel (%p15) target = $region8
    $region5: #{tpu_custom_call.1} parent=1 // loop_body
      %s19 = ssub.s32 %s14, 1
      %s20 = ssub.s32 %s14, 2
      %s21 = sadd.s32 %s14, 1
      %s22 = ssub.s32 %s14, %s21
      %p23 = scmp.eq.s32.totalorder %s22, 0
      %s25 = sadd.s32 %s24, 1
      %s26 = scalar_select %p23, %s24, %s25
      %p29 = pneg %p23
      %p30 = scmp.eq.s32.totalorder %s14, 1
      %p31 = por %p29, %p30
      %p32 = scmp.ne.s32.totalorder %s24, %s27
      %p33 = scmp.eq.s32.totalorder %s14, 0
      %p34 = por %p32, %p33
      %p35 = scmp.ne.s32.totalorder %s24, %s27
      %p36 = scmp.eq.s32.totalorder %s19, 1
      %p37 = por %p35, %p36
      %p38 = scmp.ne.s32.totalorder %s27, %s28
      %p39 = scmp.eq.s32.totalorder %s19, 0
      %p40 = por %p38, %p39
      %p41 = scmp.ne.s32.totalorder %s27, %s28
      %p42 = scmp.eq.s32.totalorder %s20, 1
      %p43 = por %p41, %p42
      %p45 = scmp.ne.s32.totalorder %s28, %s44
      %p46 = scmp.eq.s32.totalorder %s20, 0
      %p47 = por %p45, %p46
      %s48 = ssub.s32 %s14, %s21
      %p49 = scmp.eq.s32.totalorder %s48, 0
      %s51 = sadd.s32 %s50, 1
      %s52 = scalar_select %p49, %s50, %s51
      %p55 = pneg %p49
      %p56 = scmp.eq.s32.totalorder %s14, 1
      %p57 = por %p55, %p56
      %p58 = scmp.ne.s32.totalorder %s50, %s53
      %p59 = scmp.eq.s32.totalorder %s14, 0
      %p60 = por %p58, %p59
      %p61 = scmp.ne.s32.totalorder %s50, %s53
      %p62 = scmp.eq.s32.totalorder %s19, 1
      %p63 = por %p61, %p62
      %p64 = scmp.ne.s32.totalorder %s53, %s54
      %p65 = scmp.eq.s32.totalorder %s19, 0
      %p66 = por %p64, %p65
      %p67 = scmp.ne.s32.totalorder %s53, %s54
      %p68 = scmp.eq.s32.totalorder %s20, 1
      %p69 = por %p67, %p68
      %p71 = scmp.ne.s32.totalorder %s54, %s70
      %p72 = scmp.eq.s32.totalorder %s20, 0
      %p73 = por %p71, %p72
      %s75 = sadd.s32 %s74, 1
      %p78 = scmp.eq.s32.totalorder %s14, 1
      %p79 = scmp.ne.s32.totalorder %s74, %s76
      %p80 = scmp.eq.s32.totalorder %s14, 0
      %p81 = por %p79, %p80
      %p82 = scmp.ne.s32.totalorder %s74, %s76
      %p83 = scmp.eq.s32.totalorder %s19, 1
      %p84 = por %p82, %p83
      %p85 = scmp.ne.s32.totalorder %s76, %s77
      %p86 = scmp.eq.s32.totalorder %s19, 0
      %p87 = por %p85, %p86
      %p88 = scmp.ne.s32.totalorder %s76, %s77
      %p89 = scmp.eq.s32.totalorder %s20, 1
      %p90 = por %p88, %p89
      %p92 = scmp.ne.s32.totalorder %s77, %s91
      %p93 = scmp.eq.s32.totalorder %s20, 0
      %p94 = por %p92, %p93
      %s96 = sadd.s32 %s95, 1
      %p99 = scmp.eq.s32.totalorder %s14, 1
      %p100 = scmp.ne.s32.totalorder %s95, %s97
      %p101 = scmp.eq.s32.totalorder %s14, 0
      %p102 = por %p100, %p101
      %p103 = scmp.ne.s32.totalorder %s95, %s97
      %p104 = scmp.eq.s32.totalorder %s19, 1
      %p105 = por %p103, %p104
      %p106 = scmp.ne.s32.totalorder %s97, %s98
      %p107 = scmp.eq.s32.totalorder %s19, 0
      %p108 = por %p106, %p107
      %p109 = scmp.ne.s32.totalorder %s97, %s98
      %p110 = scmp.eq.s32.totalorder %s20, 1
      %p111 = por %p109, %p110
      %p113 = scmp.ne.s32.totalorder %s98, %s112
      %p114 = scmp.eq.s32.totalorder %s20, 0
      %p115 = por %p113, %p114
      %s117 = sadd.s32 %s116, 1
      %p120 = scmp.eq.s32.totalorder %s14, 1
      %p121 = scmp.ne.s32.totalorder %s116, %s118
      %p122 = scmp.eq.s32.totalorder %s14, 0
      %p123 = por %p121, %p122
      %p124 = scmp.ne.s32.totalorder %s116, %s118
      %p125 = scmp.eq.s32.totalorder %s19, 1
      %p126 = por %p124, %p125
      %p127 = scmp.ne.s32.totalorder %s118, %s119
      %p128 = scmp.eq.s32.totalorder %s19, 0
      %p129 = por %p127, %p128
      %p130 = scmp.ne.s32.totalorder %s118, %s119
      %p131 = scmp.eq.s32.totalorder %s20, 1
      %p132 = por %p130, %p131
      %p134 = scmp.ne.s32.totalorder %s119, %s133
      %p135 = scmp.eq.s32.totalorder %s20, 0
      %p136 = por %p134, %p135
      %s137 = ssub.s32 %s14, %s21
      %p138 = scmp.eq.s32.totalorder %s137, 0
      %s140 = sadd.s32 %s139, 1
      %s141 = scalar_select %p138, %s139, %s140
      %p144 = pneg %p138
      %p145 = scmp.eq.s32.totalorder %s14, 1
      %p146 = por %p144, %p145
      %p147 = scmp.ne.s32.totalorder %s139, %s142
      %p148 = scmp.eq.s32.totalorder %s14, 0
      %p149 = por %p147, %p148
      %p150 = scmp.ne.s32.totalorder %s139, %s142
      %p151 = scmp.eq.s32.totalorder %s19, 1
      %p152 = por %p150, %p151
      %p153 = scmp.ne.s32.totalorder %s142, %s143
      %p154 = scmp.eq.s32.totalorder %s19, 0
      %p155 = por %p153, %p154
      %p156 = scmp.ne.s32.totalorder %s142, %s143
      %p157 = scmp.eq.s32.totalorder %s20, 1
      %p158 = por %p156, %p157
      %p160 = scmp.ne.s32.totalorder %s143, %s159
      %p161 = scmp.eq.s32.totalorder %s20, 0
      %p162 = por %p160, %p161
      %p163 = scmp.le.s32.totalorder 1, %s14
      %p164 = scmp.lt.s32.totalorder %s14, 3
      %p165 = pnand %p163, %p164
      %p166 = pneg %p165
      // Predicated region
      $region9: #{tpu_custom_call.1} parent=5 // pred_check
        _
      $region10: #{tpu_custom_call.1} parent=5 // pred_check_branch
        %168 = sbr.rel (%p165) target = $region12
      $region11: #{tpu_custom_call.1} parent=5 // pred_region
        %s169 = ssub.s32 %s14, 1
        // Predicated region
        $region13: #{tpu_custom_call.1} parent=11 // pred_check
          %p170 = pneg %p87
        $region14: #{tpu_custom_call.1} parent=11 // pred_check_branch
          %172 = sbr.rel (%p170) target = $region16
        $region15: #{tpu_custom_call.1} parent=11 // pred_region
          _
        $region16: #{tpu_custom_call.1} parent=11 // pred_fallthru
          _
        // Predicated region
        $region17: #{tpu_custom_call.1} parent=11 // pred_check
          %p173 = pneg %p108
        $region18: #{tpu_custom_call.1} parent=11 // pred_check_branch
          %175 = sbr.rel (%p173) target = $region20
        $region19: #{tpu_custom_call.1} parent=11 // pred_region
          _
        $region20: #{tpu_custom_call.1} parent=11 // pred_fallthru
          _
        // Predicated region
        $region21: #{tpu_custom_call.1} parent=11 // pred_check
          %p176 = pneg %p129
        $region22: #{tpu_custom_call.1} parent=11 // pred_check_branch
          %178 = sbr.rel (%p176) target = $region24
        $region23: #{tpu_custom_call.1} parent=11 // pred_region
          _
        $region24: #{tpu_custom_call.1} parent=11 // pred_fallthru
          _
      $region12: #{tpu_custom_call.1} parent=5 // pred_fallthru
        _
      %p179 = scmp.lt.s32.totalorder %s14, 2
      // Predicated region
      $region25: #{tpu_custom_call.1} parent=5 // pred_check
        %p180 = pneg %p179
      $region26: #{tpu_custom_call.1} parent=5 // pred_check_branch
        %182 = sbr.rel (%p180) target = $region28
      $region27: #{tpu_custom_call.1} parent=5 // pred_region
        // Predicated region
        $region29: #{tpu_custom_call.1} parent=27 // pred_check
          %p183 = pneg %p34
        $region30: #{tpu_custom_call.1} parent=27 // pred_check_branch
          %185 = sbr.rel (%p183) target = $region32
        $region31: #{tpu_custom_call.1} parent=27 // pred_region
          %p186 = scmp.lt.s32.totalorder %s14, 1
          %s187 = scalar_select %p186, %s14, 1
          %s188 = smul.addr %s187, 8
          %s189 = scalar_lea.vmem %s0, %s188
        $region32: #{tpu_custom_call.1} parent=27 // pred_fallthru
          _
        // Predicated region
        $region33: #{tpu_custom_call.1} parent=27 // pred_check
          %p190 = pneg %p60
        $region34: #{tpu_custom_call.1} parent=27 // pred_check_branch
          %192 = sbr.rel (%p190) target = $region36
        $region35: #{tpu_custom_call.1} parent=27 // pred_region
          %p193 = scmp.lt.s32.totalorder %s14, 1
          %s194 = scalar_select %p193, %s14, 1
          %s195 = smul.addr %s194, 2
          %s196 = smul.addr %s195, 8
          %s197 = scalar_lea.vmem %s1, %s196
        $region36: #{tpu_custom_call.1} parent=27 // pred_fallthru
          _
      $region28: #{tpu_custom_call.1} parent=5 // pred_fallthru
        _
      %p198 = scmp.le.s32.totalorder 1, %s14
      %p199 = scmp.lt.s32.totalorder %s14, 3
      %p200 = pnand %p198, %p199
      %p201 = pneg %p200
      // Predicated region
      $region37: #{tpu_custom_call.1} parent=5 // pred_check
        _
      $region38: #{tpu_custom_call.1} parent=5 // pred_check_branch
        %203 = sbr.rel (%p200) target = $region40
      $region39: #{tpu_custom_call.1} parent=5 // pred_region
        %s204 = ssub.s32 %s14, 1
        %p205 = scmp.lt.s32.totalorder %s19, 1
        %s206 = scalar_select %p205, %s19, 1
        %s207 = smul.addr %s206, 8
        %s208 = scalar_lea.vmem %s0, %s207
        %p209 = pneg %p40
        %p210 = pneg %p37
        %p211 = scmp.lt.s32.totalorder %s19, 1
        %s212 = scalar_select %p211, %s19, 1
        %s213 = smul.addr %s212, 2
        %s214 = smul.addr %s213, 8
        %s215 = scalar_lea.vmem %s1, %s214
        %p216 = pneg %p66
        %p217 = pneg %p63
        %p218 = pneg %p87
        %p219 = pneg %p84
        %p220 = pneg %p108
        %p221 = pneg %p105
        %p222 = pneg %p129
        %p223 = pneg %p126
        %p224 = pneg %p155
        %p225 = pneg %p152
        %s226 = sand.u32 %s142, 1
        %s227 = scalar_lea.sflag [#allocation3], %s226
        %s228 = sand.u32 %s142, 1
        %s229 = smul.addr %s228, 8
        %s230 = scalar_lea.vmem [#allocation2], %s229
        %p231 = scmp.lt.s32.totalorder %s19, 1
        %s232 = scalar_select %p231, %s19, 1
        %s233 = smul.addr %s232, 8
        %s234 = scalar_lea.vmem %s0, %s233
        %p235 = scmp.lt.s32.totalorder %s19, 1
        %s236 = scalar_select %p235, %s19, 1
        %s237 = smul.addr %s236, 2
        %s238 = smul.addr %s237, 8
        %s239 = scalar_lea.vmem %s1, %s238
        %v241 = vld [vmem:[%s234] sm:$0xff]
        %v242 = vpack.c.bf16 %v241, %v241
        %v243 = vld [vmem:[%s239] sm:$0xff]
        %v244 = vld [vmem:[%s239 + $0x8] sm:$0x3]
        %v245 = vpack.c.bf16 %v244, %v243
        %v246 = vld [vmem:[%s2] sm:$0xf]
        %v247 = vld [vmem:[%s2 + $0x4] sm:$0xf]
        %v248 = vld [vmem:[%s2 + $0x8] sm:$0xf]
        %v249 = vld [vmem:[%s2 + $0xc] sm:$0xf]
        %v254 = vunpack.c.l.b16 %v246
        %v255 = vunpack.c.l.b16 %v247
        %v256 = vunpack.c.l.b16 %v248
        %v257 = vunpack.c.l.b16 %v249
        %v258 = vpack.c.b16 %v255, %v254
        %v259 = vpack.c.b16 %v257, %v256
        %vm262 = vcmask 261120
        %v264 = vsel %vm262, %v242, 0
        %266 = vmatprep.subr.bf16.mxu0 0
        %267 = vmatpush1.bf16.msra.mxu0 %v258
        %268 = vmatprep.subr.bf16.mxu0 0
        %269 = vmatpush1.bf16.msra.mxu0 %v259
        %270 = vmatprep.subr.bf16.mxu0 0
        %271 = vmatpush1.bf16.msra.mxu0 0
        %272 = vmatprep.subr.bf16.mxu0 0
        %273 = vmatpush1.bf16.msra.mxu0 0
        %274 = vmatprep.subr.bf16.mxu0 0
        %275 = vmatpush1.bf16.msra.mxu0 0
        %276 = vmatprep.subr.bf16.mxu0 0
        %277 = vmatpush1.bf16.msra.mxu0 0
        %278 = vmatprep.subr.bf16.mxu0 0
        %279 = vmatpush1.bf16.msra.mxu0 0
        %280 = vmatprep.subr.bf16.mxu0 0
        %281 = vmatpush1.bf16.msra.mxu0 0
        %282 = vmatprep.subr.bf16.mxu0 0
        %283 = vmatpush1.bf16.msra.mxu0 0
        %284 = vmatprep.subr.bf16.mxu0 0
        %285 = vmatpush1.bf16.msra.mxu0 0
        %286 = vmatprep.subr.bf16.mxu0 0
        %287 = vmatpush1.bf16.msra.mxu0 0
        %288 = vmatprep.subr.bf16.mxu0 0
        %289 = vmatpush1.bf16.msra.mxu0 0
        %290 = vmatprep.subr.bf16.mxu0 0
        %291 = vmatpush1.bf16.msra.mxu0 0
        %292 = vmatprep.subr.bf16.mxu0 0
        %293 = vmatpush1.bf16.msra.mxu0 0
        %294 = vmatprep.subr.bf16.mxu0 0
        %295 = vmatpush1.bf16.msra.mxu0 0
        %296 = vmatprep.subr.bf16.mxu0 0
        %297 = vmatpush1.bf16.msra.mxu0 0
        %298 = vmatprep.mubr.bf16.mxu0 0
        %299 = vmatmul.mubr.bf16.gmra.mrb[0].mxu0 %v264
        %v300 = vpop.f32.mrb[0].mxu0
        %v301 = vadd.f32 0.0, %v300
        %v302 = vpop.f32.mrb[0].mxu0
        %v303 = vpop.f32.mrb[0].mxu0
        %v304 = vpop.f32.mrb[0].mxu0
        %305 = vdwg.mxu0
        %v306 = vld [vmem:[%s3] sm:$0xf]
        %v307 = vld [vmem:[%s3 + $0x4] sm:$0xf]
        %v308 = vld [vmem:[%s3 + $0x8] sm:$0xf]
        %v309 = vld [vmem:[%s3 + $0xc] sm:$0xf]
        %v314 = vunpack.c.l.b16 %v306
        %v315 = vunpack.c.l.b16 %v307
        %v316 = vunpack.c.l.b16 %v308
        %v317 = vunpack.c.l.b16 %v309
        %v318 = vpack.c.b16 %v315, %v314
        %v319 = vpack.c.b16 %v317, %v316
        %v323 = vsel %vm262, %v245, 0
        %325 = vmatprep.subr.bf16.mxu0 0
        %326 = vmatpush1.bf16.msra.mxu0 %v318
        %327 = vmatprep.subr.bf16.mxu0 0
        %328 = vmatpush1.bf16.msra.mxu0 %v319
        %329 = vmatprep.subr.bf16.mxu0 0
        %330 = vmatpush1.bf16.msra.mxu0 0
        %331 = vmatprep.subr.bf16.mxu0 0
        %332 = vmatpush1.bf16.msra.mxu0 0
        %333 = vmatprep.subr.bf16.mxu0 0
        %334 = vmatpush1.bf16.msra.mxu0 0
        %335 = vmatprep.subr.bf16.mxu0 0
        %336 = vmatpush1.bf16.msra.mxu0 0
        %337 = vmatprep.subr.bf16.mxu0 0
        %338 = vmatpush1.bf16.msra.mxu0 0
        %339 = vmatprep.subr.bf16.mxu0 0
        %340 = vmatpush1.bf16.msra.mxu0 0
        %341 = vmatprep.subr.bf16.mxu0 0
        %342 = vmatpush1.bf16.msra.mxu0 0
        %343 = vmatprep.subr.bf16.mxu0 0
        %344 = vmatpush1.bf16.msra.mxu0 0
        %345 = vmatprep.subr.bf16.mxu0 0
        %346 = vmatpush1.bf16.msra.mxu0 0
        %347 = vmatprep.subr.bf16.mxu0 0
        %348 = vmatpush1.bf16.msra.mxu0 0
        %349 = vmatprep.subr.bf16.mxu0 0
        %350 = vmatpush1.bf16.msra.mxu0 0
        %351 = vmatprep.subr.bf16.mxu0 0
        %352 = vmatpush1.bf16.msra.mxu0 0
        %353 = vmatprep.subr.bf16.mxu0 0
        %354 = vmatpush1.bf16.msra.mxu0 0
        %355 = vmatprep.subr.bf16.mxu0 0
        %356 = vmatpush1.bf16.msra.mxu0 0
        %357 = vmatprep.mubr.bf16.mxu0 0
        %358 = vmatmul.mubr.bf16.gmra.mrb[0].mxu0 %v323
        %v359 = vpop.f32.mrb[0].mxu0
        %v360 = vadd.f32 0.0, %v359
        %v361 = vpop.f32.mrb[0].mxu0
        %v362 = vpop.f32.mrb[0].mxu0
        %v363 = vadd.f32 0.0, %v362
        %v364 = vpop.f32.mrb[0].mxu0
        %365 = vdwg.mxu0
        %v366 = vld [vmem:[%s4] sm:$0xf]
        %v367 = vld [vmem:[%s4 + $0x4] sm:$0xf]
        %v368 = vld [vmem:[%s4 + $0x8] sm:$0xf]
        %v369 = vld [vmem:[%s4 + $0xc] sm:$0xf]
        %v374 = vunpack.c.l.b16 %v366
        %v375 = vunpack.c.l.b16 %v367
        %v376 = vunpack.c.l.b16 %v368
        %v377 = vunpack.c.l.b16 %v369
        %v378 = vpack.c.b16 %v375, %v374
        %v379 = vpack.c.b16 %v377, %v376
        %382 = vmatprep.subr.bf16.mxu0 0
        %383 = vmatpush1.bf16.msra.mxu0 %v378
        %384 = vmatprep.subr.bf16.mxu0 0
        %385 = vmatpush1.bf16.msra.mxu0 %v379
        %386 = vmatprep.subr.bf16.mxu0 0
        %387 = vmatpush1.bf16.msra.mxu0 0
        %388 = vmatprep.subr.bf16.mxu0 0
        %389 = vmatpush1.bf16.msra.mxu0 0
        %390 = vmatprep.subr.bf16.mxu0 0
        %391 = vmatpush1.bf16.msra.mxu0 0
        %392 = vmatprep.subr.bf16.mxu0 0
        %393 = vmatpush1.bf16.msra.mxu0 0
        %394 = vmatprep.subr.bf16.mxu0 0
        %395 = vmatpush1.bf16.msra.mxu0 0
        %396 = vmatprep.subr.bf16.mxu0 0
        %397 = vmatpush1.bf16.msra.mxu0 0
        %398 = vmatprep.subr.bf16.mxu0 0
        %399 = vmatpush1.bf16.msra.mxu0 0
        %400 = vmatprep.subr.bf16.mxu0 0
        %401 = vmatpush1.bf16.msra.mxu0 0
        %402 = vmatprep.subr.bf16.mxu0 0
        %403 = vmatpush1.bf16.msra.mxu0 0
        %404 = vmatprep.subr.bf16.mxu0 0
        %405 = vmatpush1.bf16.msra.mxu0 0
        %406 = vmatprep.subr.bf16.mxu0 0
        %407 = vmatpush1.bf16.msra.mxu0 0
        %408 = vmatprep.subr.bf16.mxu0 0
        %409 = vmatpush1.bf16.msra.mxu0 0
        %410 = vmatprep.subr.bf16.mxu0 0
        %411 = vmatpush1.bf16.msra.mxu0 0
        %412 = vmatprep.subr.bf16.mxu0 0
        %413 = vmatpush1.bf16.msra.mxu0 0
        %414 = vmatprep.mubr.bf16.mxu0 0
        %415 = vmatmul.mubr.bf16.gmra.mrb[0].mxu0 %v323
        %v416 = vpop.f32.mrb[0].mxu0
        %v417 = vadd.f32 0.0, %v416
        %v418 = vpop.f32.mrb[0].mxu0
        %v419 = vpop.f32.mrb[0].mxu0
        %v420 = vadd.f32 0.0, %v419
        %v421 = vpop.f32.mrb[0].mxu0
        %422 = vdwg.mxu0
        %v423 = vpack.c.bf16 %v301, %v301
        %v424 = vpack.c.bf16 %v363, %v360
        %v425 = vpack.c.bf16 %v420, %v417
        %vm426 = vcmask 130048
        %v428 = vsel %vm426, %v423, 0
        %v431 = vsel %vm426, %v424, 0
        %433 = vmatprep.subr.bf16.mxu0 0
        %434 = vmatpush1.bf16.xpose.msra.mxu0 %v431
        %435 = vmatprep.subr.bf16.mxu0 0
        %436 = vmatpush1.bf16.xpose.msra.mxu0 0
        %437 = vmatprep.subr.bf16.mxu0 0
        %438 = vmatpush1.bf16.xpose.msra.mxu0 0
        %439 = vmatprep.subr.bf16.mxu0 0
        %440 = vmatpush1.bf16.xpose.msra.mxu0 0
        %441 = vmatprep.subr.bf16.mxu0 0
        %442 = vmatpush1.bf16.xpose.msra.mxu0 0
        %443 = vmatprep.subr.bf16.mxu0 0
        %444 = vmatpush1.bf16.xpose.msra.mxu0 0
        %445 = vmatprep.subr.bf16.mxu0 0
        %446 = vmatpush1.bf16.xpose.msra.mxu0 0
        %447 = vmatprep.subr.bf16.mxu0 0
        %448 = vmatpush1.bf16.xpose.msra.mxu0 0
        %449 = vmatprep.subr.bf16.mxu0 0
        %450 = vmatpush1.bf16.xpose.msra.mxu0 0
        %451 = vmatprep.subr.bf16.mxu0 0
        %452 = vmatpush1.bf16.xpose.msra.mxu0 0
        %453 = vmatprep.subr.bf16.mxu0 0
        %454 = vmatpush1.bf16.xpose.msra.mxu0 0
        %455 = vmatprep.subr.bf16.mxu0 0
        %456 = vmatpush1.bf16.xpose.msra.mxu0 0
        %457 = vmatprep.subr.bf16.mxu0 0
        %458 = vmatpush1.bf16.xpose.msra.mxu0 0
        %459 = vmatprep.subr.bf16.mxu0 0
        %460 = vmatpush1.bf16.xpose.msra.mxu0 0
        %461 = vmatprep.subr.bf16.mxu0 0
        %462 = vmatpush1.bf16.xpose.msra.mxu0 0
        %463 = vmatprep.subr.bf16.mxu0 0
        %464 = vmatpush1.bf16.xpose.msra.mxu0 0
        %465 = vmatprep.mubr.bf16.mxu0 0
        %466 = vmatmul.mubr.bf16.gmra.mrb[0].mxu0 %v428
        %v467 = vpop.f32.mrb[0].mxu0
        %v468 = vadd.f32 0.0, %v467
        %v469 = vpop.f32.mrb[0].mxu0
        %v470 = vpop.f32.mrb[0].mxu0
        %v471 = vpop.f32.mrb[0].mxu0
        %472 = vdwg.mxu0
        %vm473 = vcmask 80896
        %v474 = vsel %vm473, %v468, -inf
        %475 = vmax.xlane.f32.xlu0 %v474
        %v476 = vpop.xlane.xlu0 %475
        %v477 = vsub.f32 %v468, %v476
        %v478 = vmul.f32 %v477, 1.442695
        %v479 = vpow.pop %v478
        %v480 = vsel %vm473, %v479, 0.0
        %481 = vadd.xlane.f32.xlu0 %v480
        %v482 = vpop.xlane.xlu0 %481
        %v483 = vrcp.pop %v482
        %v484 = vmul.f32 %v479, %v483
        %v485 = vpack.c.bf16 %v484, %v484
        %v487 = vsel %vm473, %v485, 0
        %vm489 = vcmask 1044480
        %v491 = vsel %vm489, %v425, 0
        %493 = vmatprep.subr.bf16.mxu0 0
        %494 = vmatpush1.bf16.msra.mxu0 %v491
        %495 = vmatprep.subr.bf16.mxu0 0
        %496 = vmatpush1.bf16.msra.mxu0 0
        %497 = vmatprep.subr.bf16.mxu0 0
        %498 = vmatpush1.bf16.msra.mxu0 0
        %499 = vmatprep.subr.bf16.mxu0 0
        %500 = vmatpush1.bf16.msra.mxu0 0
        %501 = vmatprep.subr.bf16.mxu0 0
        %502 = vmatpush1.bf16.msra.mxu0 0
        %503 = vmatprep.subr.bf16.mxu0 0
        %504 = vmatpush1.bf16.msra.mxu0 0
        %505 = vmatprep.subr.bf16.mxu0 0
        %506 = vmatpush1.bf16.msra.mxu0 0
        %507 = vmatprep.subr.bf16.mxu0 0
        %508 = vmatpush1.bf16.msra.mxu0 0
        %509 = vmatprep.subr.bf16.mxu0 0
        %510 = vmatpush1.bf16.msra.mxu0 0
        %511 = vmatprep.subr.bf16.mxu0 0
        %512 = vmatpush1.bf16.msra.mxu0 0
        %513 = vmatprep.subr.bf16.mxu0 0
        %514 = vmatpush1.bf16.msra.mxu0 0
        %515 = vmatprep.subr.bf16.mxu0 0
        %516 = vmatpush1.bf16.msra.mxu0 0
        %517 = vmatprep.subr.bf16.mxu0 0
        %518 = vmatpush1.bf16.msra.mxu0 0
        %519 = vmatprep.subr.bf16.mxu0 0
        %520 = vmatpush1.bf16.msra.mxu0 0
        %521 = vmatprep.subr.bf16.mxu0 0
        %522 = vmatpush1.bf16.msra.mxu0 0
        %523 = vmatprep.subr.bf16.mxu0 0
        %524 = vmatpush1.bf16.msra.mxu0 0
        %525 = vmatprep.mubr.bf16.mxu0 0
        %526 = vmatmul.mubr.bf16.gmra.mrb[0].mxu0 %v487
        %v527 = vpop.f32.mrb[0].mxu0
        %v528 = vadd.f32 0.0, %v527
        %v529 = vpop.f32.mrb[0].mxu0
        %v530 = vpop.f32.mrb[0].mxu0
        %v531 = vpop.f32.mrb[0].mxu0
        %532 = vdwg.mxu0
        %534 = vrot.lane.b32.xlu0 %v423, 112
        %v535 = vpop.permute.xlu0 %534
        %537 = vrot.lane.b32.xlu0 %v424, 112
        %v538 = vpop.permute.xlu0 %537
        %v540 = vsel %vm426, %v535, 0
        %v543 = vsel %vm426, %v538, 0
        %545 = vmatprep.subr.bf16.mxu0 0
        %546 = vmatpush1.bf16.xpose.msra.mxu0 %v543
        %547 = vmatprep.subr.bf16.mxu0 0
        %548 = vmatpush1.bf16.xpose.msra.mxu0 0
        %549 = vmatprep.subr.bf16.mxu0 0
        %550 = vmatpush1.bf16.xpose.msra.mxu0 0
        %551 = vmatprep.subr.bf16.mxu0 0
        %552 = vmatpush1.bf16.xpose.msra.mxu0 0
        %553 = vmatprep.subr.bf16.mxu0 0
        %554 = vmatpush1.bf16.xpose.msra.mxu0 0
        %555 = vmatprep.subr.bf16.mxu0 0
        %556 = vmatpush1.bf16.xpose.msra.mxu0 0
        %557 = vmatprep.subr.bf16.mxu0 0
        %558 = vmatpush1.bf16.xpose.msra.mxu0 0
        %559 = vmatprep.subr.bf16.mxu0 0
        %560 = vmatpush1.bf16.xpose.msra.mxu0 0
        %561 = vmatprep.subr.bf16.mxu0 0
        %562 = vmatpush1.bf16.xpose.msra.mxu0 0
        %563 = vmatprep.subr.bf16.mxu0 0
        %564 = vmatpush1.bf16.xpose.msra.mxu0 0
        %565 = vmatprep.subr.bf16.mxu0 0
        %566 = vmatpush1.bf16.xpose.msra.mxu0 0
        %567 = vmatprep.subr.bf16.mxu0 0
        %568 = vmatpush1.bf16.xpose.msra.mxu0 0
        %569 = vmatprep.subr.bf16.mxu0 0
        %570 = vmatpush1.bf16.xpose.msra.mxu0 0
        %571 = vmatprep.subr.bf16.mxu0 0
        %572 = vmatpush1.bf16.xpose.msra.mxu0 0
        %573 = vmatprep.subr.bf16.mxu0 0
        %574 = vmatpush1.bf16.xpose.msra.mxu0 0
        %575 = vmatprep.subr.bf16.mxu0 0
        %576 = vmatpush1.bf16.xpose.msra.mxu0 0
        %577 = vmatprep.mubr.bf16.mxu0 0
        %578 = vmatmul.mubr.bf16.gmra.mrb[0].mxu0 %v540
        %v579 = vpop.f32.mrb[0].mxu0
        %v580 = vadd.f32 0.0, %v579
        %v581 = vpop.f32.mrb[0].mxu0
        %v582 = vpop.f32.mrb[0].mxu0
        %v583 = vpop.f32.mrb[0].mxu0
        %584 = vdwg.mxu0
        %v585 = vsel %vm473, %v580, -inf
        %586 = vmax.xlane.f32.xlu0 %v585
        %v587 = vpop.xlane.xlu0 %586
        %v588 = vsub.f32 %v580, %v587
        %v589 = vmul.f32 %v588, 1.442695
        %v590 = vpow.pop %v589
        %v591 = vsel %vm473, %v590, 0.0
        %592 = vadd.xlane.f32.xlu0 %v591
        %v593 = vpop.xlane.xlu0 %592
        %v594 = vrcp.pop %v593
        %v595 = vmul.f32 %v590, %v594
        %v596 = vpack.c.bf16 %v595, %v595
        %598 = vrot.lane.b32.xlu0 %v425, 112
        %v599 = vpop.permute.xlu0 %598
        %v601 = vsel %vm473, %v596, 0
        %v604 = vsel %vm489, %v599, 0
        %606 = vmatprep.subr.bf16.mxu0 0
        %607 = vmatpush1.bf16.msra.mxu0 %v604
        %608 = vmatprep.subr.bf16.mxu0 0
        %609 = vmatpush1.bf16.msra.mxu0 0
        %610 = vmatprep.subr.bf16.mxu0 0
        %611 = vmatpush1.bf16.msra.mxu0 0
        %612 = vmatprep.subr.bf16.mxu0 0
        %613 = vmatpush1.bf16.msra.mxu0 0
        %614 = vmatprep.subr.bf16.mxu0 0
        %615 = vmatpush1.bf16.msra.mxu0 0
        %616 = vmatprep.subr.bf16.mxu0 0
        %617 = vmatpush1.bf16.msra.mxu0 0
        %618 = vmatprep.subr.bf16.mxu0 0
        %619 = vmatpush1.bf16.msra.mxu0 0
        %620 = vmatprep.subr.bf16.mxu0 0
        %621 = vmatpush1.bf16.msra.mxu0 0
        %622 = vmatprep.subr.bf16.mxu0 0
        %623 = vmatpush1.bf16.msra.mxu0 0
        %624 = vmatprep.subr.bf16.mxu0 0
        %625 = vmatpush1.bf16.msra.mxu0 0
        %626 = vmatprep.subr.bf16.mxu0 0
        %627 = vmatpush1.bf16.msra.mxu0 0
        %628 = vmatprep.subr.bf16.mxu0 0
        %629 = vmatpush1.bf16.msra.mxu0 0
        %630 = vmatprep.subr.bf16.mxu0 0
        %631 = vmatpush1.bf16.msra.mxu0 0
        %632 = vmatprep.subr.bf16.mxu0 0
        %633 = vmatpush1.bf16.msra.mxu0 0
        %634 = vmatprep.subr.bf16.mxu0 0
        %635 = vmatpush1.bf16.msra.mxu0 0
        %636 = vmatprep.subr.bf16.mxu0 0
        %637 = vmatpush1.bf16.msra.mxu0 0
        %638 = vmatprep.mubr.bf16.mxu0 0
        %639 = vmatmul.mubr.bf16.gmra.mrb[0].mxu0 %v601
        %v640 = vpop.f32.mrb[0].mxu0
        %v641 = vadd.f32 0.0, %v640
        %v642 = vpop.f32.mrb[0].mxu0
        %v643 = vpop.f32.mrb[0].mxu0
        %v644 = vpop.f32.mrb[0].mxu0
        %645 = vdwg.mxu0
        %646 = vrot.lane.b32.xlu0 %v423, 96
        %v647 = vpop.permute.xlu0 %646
        %648 = vrot.lane.b32.xlu0 %v424, 96
        %v649 = vpop.permute.xlu0 %648
        %v651 = vsel %vm426, %v647, 0
        %v654 = vsel %vm426, %v649, 0
        %656 = vmatprep.subr.bf16.mxu0 0
        %657 = vmatpush1.bf16.xpose.msra.mxu0 %v654
        %658 = vmatprep.subr.bf16.mxu0 0
        %659 = vmatpush1.bf16.xpose.msra.mxu0 0
        %660 = vmatprep.subr.bf16.mxu0 0
        %661 = vmatpush1.bf16.xpose.msra.mxu0 0
        %662 = vmatprep.subr.bf16.mxu0 0
        %663 = vmatpush1.bf16.xpose.msra.mxu0 0
        %664 = vmatprep.subr.bf16.mxu0 0
        %665 = vmatpush1.bf16.xpose.msra.mxu0 0
        %666 = vmatprep.subr.bf16.mxu0 0
        %667 = vmatpush1.bf16.xpose.msra.mxu0 0
        %668 = vmatprep.subr.bf16.mxu0 0
        %669 = vmatpush1.bf16.xpose.msra.mxu0 0
        %670 = vmatprep.subr.bf16.mxu0 0
        %671 = vmatpush1.bf16.xpose.msra.mxu0 0
        %672 = vmatprep.subr.bf16.mxu0 0
        %673 = vmatpush1.bf16.xpose.msra.mxu0 0
        %674 = vmatprep.subr.bf16.mxu0 0
        %675 = vmatpush1.bf16.xpose.msra.mxu0 0
        %676 = vmatprep.subr.bf16.mxu0 0
        %677 = vmatpush1.bf16.xpose.msra.mxu0 0
        %678 = vmatprep.subr.bf16.mxu0 0
        %679 = vmatpush1.bf16.xpose.msra.mxu0 0
        %680 = vmatprep.subr.bf16.mxu0 0
        %681 = vmatpush1.bf16.xpose.msra.mxu0 0
        %682 = vmatprep.subr.bf16.mxu0 0
        %683 = vmatpush1.bf16.xpose.msra.mxu0 0
        %684 = vmatprep.subr.bf16.mxu0 0
        %685 = vmatpush1.bf16.xpose.msra.mxu0 0
        %686 = vmatprep.subr.bf16.mxu0 0
        %687 = vmatpush1.bf16.xpose.msra.mxu0 0
        %688 = vmatprep.mubr.bf16.mxu0 0
        %689 = vmatmul.mubr.bf16.gmra.mrb[0].mxu0 %v651
        %v690 = vpop.f32.mrb[0].mxu0
        %v691 = vadd.f32 0.0, %v690
        %v692 = vpop.f32.mrb[0].mxu0
        %v693 = vpop.f32.mrb[0].mxu0
        %v694 = vpop.f32.mrb[0].mxu0
        %695 = vdwg.mxu0
        %v696 = vsel %vm473, %v691, -inf
        %697 = vmax.xlane.f32.xlu0 %v696
        %v698 = vpop.xlane.xlu0 %697
        %v699 = vsub.f32 %v691, %v698
        %v700 = vmul.f32 %v699, 1.442695
        %v701 = vpow.pop %v700
        %v702 = vsel %vm473, %v701, 0.0
        %703 = vadd.xlane.f32.xlu0 %v702
        %v704 = vpop.xlane.xlu0 %703
        %v705 = vrcp.pop %v704
        %v706 = vmul.f32 %v701, %v705
        %v707 = vpack.c.bf16 %v706, %v706
        %708 = vrot.lane.b32.xlu0 %v425, 96
        %v709 = vpop.permute.xlu0 %708
        %v711 = vsel %vm473, %v707, 0
        %v714 = vsel %vm489, %v709, 0
        %716 = vmatprep.subr.bf16.mxu0 0
        %717 = vmatpush1.bf16.msra.mxu0 %v714
        %718 = vmatprep.subr.bf16.mxu0 0
        %719 = vmatpush1.bf16.msra.mxu0 0
        %720 = vmatprep.subr.bf16.mxu0 0
        %721 = vmatpush1.bf16.msra.mxu0 0
        %722 = vmatprep.subr.bf16.mxu0 0
        %723 = vmatpush1.bf16.msra.mxu0 0
        %724 = vmatprep.subr.bf16.mxu0 0
        %725 = vmatpush1.bf16.msra.mxu0 0
        %726 = vmatprep.subr.bf16.mxu0 0
        %727 = vmatpush1.bf16.msra.mxu0 0
        %728 = vmatprep.subr.bf16.mxu0 0
        %729 = vmatpush1.bf16.msra.mxu0 0
        %730 = vmatprep.subr.bf16.mxu0 0
        %731 = vmatpush1.bf16.msra.mxu0 0
        %732 = vmatprep.subr.bf16.mxu0 0
        %733 = vmatpush1.bf16.msra.mxu0 0
        %734 = vmatprep.subr.bf16.mxu0 0
        %735 = vmatpush1.bf16.msra.mxu0 0
        %736 = vmatprep.subr.bf16.mxu0 0
        %737 = vmatpush1.bf16.msra.mxu0 0
        %738 = vmatprep.subr.bf16.mxu0 0
        %739 = vmatpush1.bf16.msra.mxu0 0
        %740 = vmatprep.subr.bf16.mxu0 0
        %741 = vmatpush1.bf16.msra.mxu0 0
        %742 = vmatprep.subr.bf16.mxu0 0
        %743 = vmatpush1.bf16.msra.mxu0 0
        %744 = vmatprep.subr.bf16.mxu0 0
        %745 = vmatpush1.bf16.msra.mxu0 0
        %746 = vmatprep.subr.bf16.mxu0 0
        %747 = vmatpush1.bf16.msra.mxu0 0
        %748 = vmatprep.mubr.bf16.mxu0 0
        %749 = vmatmul.mubr.bf16.gmra.mrb[0].mxu0 %v711
        %v750 = vpop.f32.mrb[0].mxu0
        %v751 = vadd.f32 0.0, %v750
        %v752 = vpop.f32.mrb[0].mxu0
        %v753 = vpop.f32.mrb[0].mxu0
        %v754 = vpop.f32.mrb[0].mxu0
        %755 = vdwg.mxu0
        %756 = vrot.lane.b32.xlu0 %v423, 80
        %v757 = vpop.permute.xlu0 %756
        %758 = vrot.lane.b32.xlu0 %v424, 80
        %v759 = vpop.permute.xlu0 %758
        %v761 = vsel %vm426, %v757, 0
        %v764 = vsel %vm426, %v759, 0
        %766 = vmatprep.subr.bf16.mxu0 0
        %767 = vmatpush1.bf16.xpose.msra.mxu0 %v764
        %768 = vmatprep.subr.bf16.mxu0 0
        %769 = vmatpush1.bf16.xpose.msra.mxu0 0
        %770 = vmatprep.subr.bf16.mxu0 0
        %771 = vmatpush1.bf16.xpose.msra.mxu0 0
        %772 = vmatprep.subr.bf16.mxu0 0
        %773 = vmatpush1.bf16.xpose.msra.mxu0 0
        %774 = vmatprep.subr.bf16.mxu0 0
        %775 = vmatpush1.bf16.xpose.msra.mxu0 0
        %776 = vmatprep.subr.bf16.mxu0 0
        %777 = vmatpush1.bf16.xpose.msra.mxu0 0
        %778 = vmatprep.subr.bf16.mxu0 0
        %779 = vmatpush1.bf16.xpose.msra.mxu0 0
        %780 = vmatprep.subr.bf16.mxu0 0
        %781 = vmatpush1.bf16.xpose.msra.mxu0 0
        %782 = vmatprep.subr.bf16.mxu0 0
        %783 = vmatpush1.bf16.xpose.msra.mxu0 0
        %784 = vmatprep.subr.bf16.mxu0 0
        %785 = vmatpush1.bf16.xpose.msra.mxu0 0
        %786 = vmatprep.subr.bf16.mxu0 0
        %787 = vmatpush1.bf16.xpose.msra.mxu0 0
        %788 = vmatprep.subr.bf16.mxu0 0
        %789 = vmatpush1.bf16.xpose.msra.mxu0 0
        %790 = vmatprep.subr.bf16.mxu0 0
        %791 = vmatpush1.bf16.xpose.msra.mxu0 0
        %792 = vmatprep.subr.bf16.mxu0 0
        %793 = vmatpush1.bf16.xpose.msra.mxu0 0
        %794 = vmatprep.subr.bf16.mxu0 0
        %795 = vmatpush1.bf16.xpose.msra.mxu0 0
        %796 = vmatprep.subr.bf16.mxu0 0
        %797 = vmatpush1.bf16.xpose.msra.mxu0 0
        %798 = vmatprep.mubr.bf16.mxu0 0
        %799 = vmatmul.mubr.bf16.gmra.mrb[0].mxu0 %v761
        %v800 = vpop.f32.mrb[0].mxu0
        %v801 = vadd.f32 0.0, %v800
        %v802 = vpop.f32.mrb[0].mxu0
        %v803 = vpop.f32.mrb[0].mxu0
        %v804 = vpop.f32.mrb[0].mxu0
        %805 = vdwg.mxu0
        %v806 = vsel %vm473, %v801, -inf
        %807 = vmax.xlane.f32.xlu0 %v806
        %v808 = vpop.xlane.xlu0 %807
        %v809 = vsub.f32 %v801, %v808
        %v810 = vmul.f32 %v809, 1.442695
        %v811 = vpow.pop %v810
        %v812 = vsel %vm473, %v811, 0.0
        %813 = vadd.xlane.f32.xlu0 %v812
        %v814 = vpop.xlane.xlu0 %813
        %v815 = vrcp.pop %v814
        %v816 = vmul.f32 %v811, %v815
        %v817 = vpack.c.bf16 %v816, %v816
        %818 = vrot.lane.b32.xlu0 %v425, 80
        %v819 = vpop.permute.xlu0 %818
        %v821 = vsel %vm473, %v817, 0
        %v824 = vsel %vm489, %v819, 0
        %826 = vmatprep.subr.bf16.mxu0 0
        %827 = vmatpush1.bf16.msra.mxu0 %v824
        %828 = vmatprep.subr.bf16.mxu0 0
        %829 = vmatpush1.bf16.msra.mxu0 0
        %830 = vmatprep.subr.bf16.mxu0 0
        %831 = vmatpush1.bf16.msra.mxu0 0
        %832 = vmatprep.subr.bf16.mxu0 0
        %833 = vmatpush1.bf16.msra.mxu0 0
        %834 = vmatprep.subr.bf16.mxu0 0
        %835 = vmatpush1.bf16.msra.mxu0 0
        %836 = vmatprep.subr.bf16.mxu0 0
        %837 = vmatpush1.bf16.msra.mxu0 0
        %838 = vmatprep.subr.bf16.mxu0 0
        %839 = vmatpush1.bf16.msra.mxu0 0
        %840 = vmatprep.subr.bf16.mxu0 0
        %841 = vmatpush1.bf16.msra.mxu0 0
        %842 = vmatprep.subr.bf16.mxu0 0
        %843 = vmatpush1.bf16.msra.mxu0 0
        %844 = vmatprep.subr.bf16.mxu0 0
        %845 = vmatpush1.bf16.msra.mxu0 0
        %846 = vmatprep.subr.bf16.mxu0 0
        %847 = vmatpush1.bf16.msra.mxu0 0
        %848 = vmatprep.subr.bf16.mxu0 0
        %849 = vmatpush1.bf16.msra.mxu0 0
        %850 = vmatprep.subr.bf16.mxu0 0
        %851 = vmatpush1.bf16.msra.mxu0 0
        %852 = vmatprep.subr.bf16.mxu0 0
        %853 = vmatpush1.bf16.msra.mxu0 0
        %854 = vmatprep.subr.bf16.mxu0 0
        %855 = vmatpush1.bf16.msra.mxu0 0
        %856 = vmatprep.subr.bf16.mxu0 0
        %857 = vmatpush1.bf16.msra.mxu0 0
        %858 = vmatprep.mubr.bf16.mxu0 0
        %859 = vmatmul.mubr.bf16.gmra.mrb[0].mxu0 %v821
        %v860 = vpop.f32.mrb[0].mxu0
        %v861 = vadd.f32 0.0, %v860
        %v862 = vpop.f32.mrb[0].mxu0
        %v863 = vpop.f32.mrb[0].mxu0
        %v864 = vpop.f32.mrb[0].mxu0
        %865 = vdwg.mxu0
        %867 = vrot.lane.b32.xlu0 %v641, 16
        %v868 = vpop.permute.xlu0 %867
        %871 = vrot.lane.b32.xlu0 %v751, 32
        %v872 = vpop.permute.xlu0 %871
        %875 = vrot.lane.b32.xlu0 %v861, 48
        %v876 = vpop.permute.xlu0 %875
        %v878 = vsel %vm426, %v528, %v868
        %v879 = vsel %vm262, %v878, %v872
        %vm880 = vcmask 392192
        %v881 = vsel %vm880, %v879, %v876
        %vm882 = vcmask 523264
        %883 = vst.msk [vmem:[%s230] sm:$0xff] %vm882, %v881
        %s884 = sand.u32 %s142, 1
        %s885 = scalar_lea.sflag [#allocation3], %s884
        %s886 = sand.u32 %s142, 1
        %s887 = smul.addr %s886, 8
        %s888 = scalar_lea.vmem [#allocation2], %s887
        // Predicated region
        $region41: #{tpu_custom_call.1} parent=39 // pred_check
          %p889 = pneg %p152
        $region42: #{tpu_custom_call.1} parent=39 // pred_check_branch
          %891 = sbr.rel (%p889) target = $region44
        $region43: #{tpu_custom_call.1} parent=39 // pred_region
          %s893 = ssub.s32 128, 128
          %894 = vsyncadd %s885, %s893
          %s895 = smul.addr %s19, 128
          %s896 = scalar_lea.hbm %s5, %s895
          %s898 = sshll.u32 %s888, 4
          %s899 = int_to_ptr.vmem [resolvable:$true] %s898
          %901 = dma.vmem_to_hbm [thread:$0]  %s899, 128, %s896, %s885
        $region44: #{tpu_custom_call.1} parent=39 // pred_fallthru
          _
      $region40: #{tpu_custom_call.1} parent=5 // pred_fallthru
        _
      %p902 = scmp.le.s32.totalorder 2, %s14
      // Predicated region
      $region45: #{tpu_custom_call.1} parent=5 // pred_check
        %p903 = pneg %p902
      $region46: #{tpu_custom_call.1} parent=5 // pred_check_branch
        %905 = sbr.rel (%p903) target = $region48
      $region47: #{tpu_custom_call.1} parent=5 // pred_region
        %s906 = ssub.s32 %s14, 2
        // Predicated region
        $region49: #{tpu_custom_call.1} parent=47 // pred_check
          %p907 = pneg %p158
        $region50: #{tpu_custom_call.1} parent=47 // pred_check_branch
          %909 = sbr.rel (%p907) target = $region52
        $region51: #{tpu_custom_call.1} parent=47 // pred_region
          %s910 = sand.u32 %s143, 1
          %s911 = scalar_lea.sflag [#allocation3], %s910
          %s912 = sand.u32 %s143, 1
          %s913 = smul.addr %s912, 8
          %s914 = scalar_lea.vmem [#allocation2], %s913
          %915 = dma.done %s911, 128
        $region52: #{tpu_custom_call.1} parent=47 // pred_fallthru
          _
      $region48: #{tpu_custom_call.1} parent=5 // pred_fallthru
        _
    $region6: #{tpu_custom_call.1} parent=1 // loop_footer
      %s18 = sadd.s32 1, %s14
    $region7: #{tpu_custom_call.1} parent=1 // loop_footer_branch
      %13 = sbr.rel target = $region3
    $region8: #{tpu_custom_call.1} parent=1 // loop_exit
      _
    %916 = vsyncpa [#allocation3], 1
    %s917 = scalar_lea.sflag [#allocation3], 1
    %918 = vsyncpa %s917, 1

</llo_original>
